<compile_context>
chip_gen: v5e
topology: v5e:2x2
jax: 0.10.0
libtpu: 0.0.40
codegen_flags: <defaults>
</compile_context>

<pallas_src>
import jax
import jax.numpy as jnp
from jax.experimental import pallas as pl
from jax.experimental.pallas import tpu as pltpu

NUM_ACTS = 16          # the fixed activation list of the PyTorch module
LANE = 128             # TPU lane width (keeps output stores unmasked)
TM_MAX = 2048          # 2048 x 128 x 4B = 1 MiB per block

# PyTorch default constants
_SELU_ALPHA = 1.6732632423543772848170429916717
_SELU_SCALE = 1.0507009873554804934193349852946
_RRELU_SLOPE = (1.0 / 8.0 + 1.0 / 3.0) / 2.0   # eval-mode RReLU slope
# TODO(synk): nn.RReLU in training mode samples a random slope per element; we
# implement the deterministic eval/inference-mode slope (lower + upper) / 2.

NUM_COEFFS = 12


def _aaf_kernel(c_ref, x_ref, o_ref):
    """c_ref: SMEM (12,) f32 folded coefficients; x_ref/o_ref: VMEM (tm, 128) f32."""
    x = x_ref[...]

    abs_x = jnp.abs(x)
    pos = jnp.maximum(x, 0.0)
    neg = jnp.minimum(x, 0.0)

    # Shared transcendentals: 3 EUP pushes per element (exp, log1p, tanh)
    # instead of ~9 in the naive per-activation formulation.
    e = jnp.exp(-abs_x)            # == exp(x) on x <= 0, exp(-x) on x >= 0
    sp = jnp.log1p(e)              # stable softplus(-|x|)
    tanh_x = jnp.tanh(x)

    # Negative-branch expm1: expm1(x) for x <= 0, else 0 (shared by ELU/SELU/CELU).
    em1n = jnp.where(x > 0.0, 0.0, e - 1.0)
    # Sigmoid from the shared exp.  Exact division (not approx recip) keeps the
    # result within the self-test tolerance.
    inv1pe = 1.0 / (1.0 + e)
    sig = jnp.where(x >= 0.0, inv1pe, e * inv1pe)

    # Inline accumulation of the folded weighted sum (short live ranges, no zeros init).
    res = c_ref[0] * x                                       # Tanhshrink/Softshrink linear part
    res = res + c_ref[1] * pos                               # ReLU-like positive parts
    res = res + c_ref[2] * neg                               # LeakyReLU/LogSigmoid/RReLU neg parts
    res = res + c_ref[3] * em1n                              # ELU/SELU/CELU exponential parts
    res = res + c_ref[4] * sp                                # Softplus (+) / LogSigmoid (-)
    res = res + c_ref[5] * tanh_x                            # Tanh (+) / Tanhshrink (-)
    res = res + c_ref[6] * sig                               # Sigmoid
    res = res + c_ref[7] * jnp.where(abs_x > 0.5, x, 0.0)    # Hardshrink
    res = res + c_ref[8] * jnp.clip(x, -1.0, 1.0)            # Hardtanh
    res = res + c_ref[9] * jnp.clip(x, 0.0, 6.0)             # ReLU6
    res = res + c_ref[10] * jnp.clip(x, -0.5, 0.5)           # -P12 * clamp (Softshrink fold)
    res = res + c_ref[11] * (x / (1.0 + abs_x))              # Softsign
    o_ref[...] = res


def _fold_coeffs(P):
    """Fold the 16 activation weights into 12 coefficients of shared base functions."""
    n = min(P.shape[0], NUM_ACTS)
    p = jnp.zeros((NUM_ACTS,), jnp.float32).at[:n].set(P[:n].astype(jnp.float32))
    # ELU(1) == CELU(1) == pos + em1n ; SELU = scale*pos + scale*alpha*em1n
    # LeakyReLU = pos + 0.01*neg ; RReLU(eval) = pos + slope*neg ; Softplus = pos + sp
    # LogSigmoid = neg - sp ; Softshrink = x - clip(x,-.5,.5) ; Tanhshrink = x - tanh
    c_x = p[15] + p[12]
    c_pos = p[0] + p[3] + p[5] + p[7] + _SELU_SCALE * p[8] + p[9] + p[11]
    c_neg = 0.01 * p[3] + p[4] + _RRELU_SLOPE * p[7]
    c_em1n = p[0] + _SELU_SCALE * _SELU_ALPHA * p[8] + p[9]
    c_sp = p[11] - p[4]
    c_tanh = p[14] - p[15]
    return jnp.stack([c_x, c_pos, c_neg, c_em1n, c_sp, c_tanh,
                      p[10], p[1], p[2], p[6], -p[12], p[13]])


@jax.jit
def aaf_forward(x, P):
    """res = sum_i P[i] * F_i(x) — matches AAF.forward (eval-mode semantics)."""
    coeffs = _fold_coeffs(P)

    orig_shape = x.shape
    total = x.size

    xf = x.reshape(-1).astype(jnp.float32)
    # Only pad a (rare) ragged tail up to a lane multiple; typical NCHW feature
    # maps already have total % 128 == 0, so this is a free reshape (no HBM copy).
    pad = (-total) % LANE
    if pad:
        xf = jnp.pad(xf, (0, pad))
    M = xf.size // LANE
    x2 = xf.reshape(M, LANE)

    # Large tile (1 MiB) or the full array if it is smaller; partial boundary
    # blocks are handled by Pallas (grid = cdiv), so no full-array padding copy.
    tm = TM_MAX if M >= TM_MAX else M
    grid = (pl.cdiv(M, tm),)

    out = pl.pallas_call(
        _aaf_kernel,
        out_shape=jax.ShapeDtypeStruct((M, LANE), jnp.float32),
        grid_spec=pltpu.PrefetchScalarGridSpec(
            num_scalar_prefetch=1,
            grid=grid,
            in_specs=[pl.BlockSpec((tm, LANE), lambda i, c: (i, 0))],
            out_specs=pl.BlockSpec((tm, LANE), lambda i, c: (i, 0)),
        ),
        compiler_params=pltpu.CompilerParams(
            dimension_semantics=("parallel",),
        ),
    )(coeffs, x2)

    out = out.reshape(-1)
    if pad:
        out = out[:total]
    return out.reshape(orig_shape)


def _aaf_reference(x, P):
    """Pure-JAX reference (per-activation math, no folding) for verification."""
    x = x.astype(jnp.float32)
    acts = [
        jnp.where(x > 0, x, jnp.expm1(x)),                                   # ELU
        jnp.where(jnp.abs(x) > 0.5, x, 0.0),                                 # Hardshrink
        jnp.clip(x, -1.0, 1.0),                                              # Hardtanh
        jnp.where(x > 0, x, 0.01 * x),                                       # LeakyReLU
        -jnp.logaddexp(0.0, -x),                                             # LogSigmoid
        jnp.maximum(x, 0.0),                                                 # ReLU
        jnp.clip(x, 0.0, 6.0),                                               # ReLU6
        jnp.where(x >= 0, x, _RRELU_SLOPE * x),                              # RReLU (eval)
        _SELU_SCALE * jnp.where(x > 0, x, _SELU_ALPHA * jnp.expm1(x)),       # SELU
        jnp.maximum(x, 0.0) + jnp.minimum(0.0, jnp.expm1(x)),                # CELU
        jax.nn.sigmoid(x),                                                   # Sigmoid
        jnp.where(x > 20.0, x, jnp.log1p(jnp.exp(jnp.minimum(x, 20.0)))),    # Softplus
        jnp.where(x > 0.5, x - 0.5, jnp.where(x < -0.5, x + 0.5, 0.0)),      # Softshrink
        x / (1.0 + jnp.abs(x)),                                              # Softsign
        jnp.tanh(x),                                                         # Tanh
        x - jnp.tanh(x),                                                     # Tanhshrink
    ]
    res = jnp.zeros_like(x)
    for i in range(P.shape[0]):
        res = res + P[i] * acts[i]
    return res


if __name__ == "__main__":
    key = jax.random.PRNGKey(0)
    kx, kp = jax.random.split(key)

    # Small UNet-like feature map (NCHW) and 16 mixing weights P.
    x = jax.random.normal(kx, (2, 4, 16, 16), dtype=jnp.float32) * 2.0
    P = jax.random.normal(kp, (NUM_ACTS,), dtype=jnp.float32) * 0.5

    out = jax.block_until_ready(aaf_forward(x, P))
    ref = _aaf_reference(x, P)

    assert out.shape == x.shape and out.dtype == jnp.float32
    # Coefficient folding reorders the f32 accumulation relative to the
    # per-activation reference, so allow a slightly looser tolerance.
    max_diff = jnp.max(jnp.abs(out - ref))
    assert jnp.allclose(out, ref, atol=2e-5, rtol=2e-5), (
        f"mismatch vs reference; max abs diff = {max_diff}")

    print("KERNEL_OK")
</pallas_src>

<mosaic_0001>
module attributes {stable_mosaic.version = 11 : i64} {
  func.func @_aaf_kernel(%arg0: i32, %arg1: memref<12xf32, #tpu.memory_space<smem>>, %arg2: memref<16x128xf32, #tpu.memory_space<vmem>>, %arg3: memref<16x128xf32, #tpu.memory_space<vmem>>) attributes {dimension_semantics = [#tpu.dimension_semantics<parallel>], iteration_bounds = array<i64: 1>, scalar_prefetch = 1 : i64, scratch_operands = 0 : i64, tpu.core_type = #tpu.core_type<tc>, window_params = [{transform_indices = @transform_0, window_bounds = array<i64: 16, 128>}, {transform_indices = @transform_1, window_bounds = array<i64: 16, 128>}]} {
    %c0 = arith.constant 0 : index
    %c0_0 = arith.constant 0 : index
    %0 = vector.load %arg2[%c0, %c0_0] : memref<16x128xf32, #tpu.memory_space<vmem>>, vector<16x128xf32>
    %1 = math.absf %0 : vector<16x128xf32>
    %cst = arith.constant 0.000000e+00 : f32
    %2 = vector.broadcast %cst : f32 to vector<16x128xf32>
    %3 = arith.maximumf %0, %2 : vector<16x128xf32>
    %cst_1 = arith.constant 0.000000e+00 : f32
    %4 = vector.broadcast %cst_1 : f32 to vector<16x128xf32>
    %5 = arith.minimumf %0, %4 : vector<16x128xf32>
    %cst_2 = arith.constant 0.000000e+00 : f32
    %6 = vector.broadcast %cst_2 : f32 to vector<16x128xf32>
    %7 = arith.subf %6, %1 : vector<16x128xf32>
    %8 = math.exp %7 : vector<16x128xf32>
    %9 = math.log1p %8 : vector<16x128xf32>
    %10 = math.tanh %0 : vector<16x128xf32>
    %cst_3 = arith.constant 0.000000e+00 : f32
    %11 = vector.broadcast %cst_3 : f32 to vector<16x128xf32>
    %12 = arith.cmpf ogt, %0, %11 : vector<16x128xf32>
    %cst_4 = arith.constant 1.000000e+00 : f32
    %13 = vector.broadcast %cst_4 : f32 to vector<16x128xf32>
    %14 = arith.subf %8, %13 : vector<16x128xf32>
    %cst_5 = arith.constant 0.000000e+00 : f32
    %15 = vector.broadcast %cst_5 : f32 to vector<16x128xf32>
    %16 = arith.select %12, %15, %14 : vector<16x128xi1>, vector<16x128xf32>
    %cst_6 = arith.constant 1.000000e+00 : f32
    %17 = vector.broadcast %cst_6 : f32 to vector<16x128xf32>
    %18 = arith.addf %17, %8 : vector<16x128xf32>
    %cst_7 = arith.constant 1.000000e+00 : f32
    %19 = vector.broadcast %cst_7 : f32 to vector<16x128xf32>
    %20 = arith.divf %19, %18 : vector<16x128xf32>
    %cst_8 = arith.constant 0.000000e+00 : f32
    %21 = vector.broadcast %cst_8 : f32 to vector<16x128xf32>
    %22 = arith.cmpf oge, %0, %21 : vector<16x128xf32>
    %23 = arith.mulf %8, %20 : vector<16x128xf32>
    %24 = arith.select %22, %20, %23 : vector<16x128xi1>, vector<16x128xf32>
    %c0_9 = arith.constant 0 : index
    %25 = memref.load %arg1[%c0_9] : memref<12xf32, #tpu.memory_space<smem>>
    %26 = vector.broadcast %25 : f32 to vector<16x128xf32>
    %27 = arith.mulf %26, %0 : vector<16x128xf32>
    %c1 = arith.constant 1 : index
    %28 = memref.load %arg1[%c1] : memref<12xf32, #tpu.memory_space<smem>>
    %29 = vector.broadcast %28 : f32 to vector<16x128xf32>
    %30 = arith.mulf %29, %3 : vector<16x128xf32>
    %31 = arith.addf %27, %30 : vector<16x128xf32>
    %c2 = arith.constant 2 : index
    %32 = memref.load %arg1[%c2] : memref<12xf32, #tpu.memory_space<smem>>
    %33 = vector.broadcast %32 : f32 to vector<16x128xf32>
    %34 = arith.mulf %33, %5 : vector<16x128xf32>
    %35 = arith.addf %31, %34 : vector<16x128xf32>
    %c3 = arith.constant 3 : index
    %36 = memref.load %arg1[%c3] : memref<12xf32, #tpu.memory_space<smem>>
    %37 = vector.broadcast %36 : f32 to vector<16x128xf32>
    %38 = arith.mulf %37, %16 : vector<16x128xf32>
    %39 = arith.addf %35, %38 : vector<16x128xf32>
    %c4 = arith.constant 4 : index
    %40 = memref.load %arg1[%c4] : memref<12xf32, #tpu.memory_space<smem>>
    %41 = vector.broadcast %40 : f32 to vector<16x128xf32>
    %42 = arith.mulf %41, %9 : vector<16x128xf32>
    %43 = arith.addf %39, %42 : vector<16x128xf32>
    %c5 = arith.constant 5 : index
    %44 = memref.load %arg1[%c5] : memref<12xf32, #tpu.memory_space<smem>>
    %45 = vector.broadcast %44 : f32 to vector<16x128xf32>
    %46 = arith.mulf %45, %10 : vector<16x128xf32>
    %47 = arith.addf %43, %46 : vector<16x128xf32>
    %c6 = arith.constant 6 : index
    %48 = memref.load %arg1[%c6] : memref<12xf32, #tpu.memory_space<smem>>
    %49 = vector.broadcast %48 : f32 to vector<16x128xf32>
    %50 = arith.mulf %49, %24 : vector<16x128xf32>
    %51 = arith.addf %47, %50 : vector<16x128xf32>
    %c7 = arith.constant 7 : index
    %52 = memref.load %arg1[%c7] : memref<12xf32, #tpu.memory_space<smem>>
    %cst_10 = arith.constant 5.000000e-01 : f32
    %53 = vector.broadcast %cst_10 : f32 to vector<16x128xf32>
    %54 = arith.cmpf ogt, %1, %53 : vector<16x128xf32>
    %cst_11 = arith.constant 0.000000e+00 : f32
    %55 = vector.broadcast %cst_11 : f32 to vector<16x128xf32>
    %56 = arith.select %54, %0, %55 : vector<16x128xi1>, vector<16x128xf32>
    %57 = vector.broadcast %52 : f32 to vector<16x128xf32>
    %58 = arith.mulf %57, %56 : vector<16x128xf32>
    %59 = arith.addf %51, %58 : vector<16x128xf32>
    %c8 = arith.constant 8 : index
    %60 = memref.load %arg1[%c8] : memref<12xf32, #tpu.memory_space<smem>>
    %cst_12 = arith.constant -1.000000e+00 : f32
    %cst_13 = arith.constant 1.000000e+00 : f32
    %61 = vector.broadcast %cst_12 : f32 to vector<16x128xf32>
    %62 = arith.maximumf %61, %0 : vector<16x128xf32>
    %63 = vector.broadcast %cst_13 : f32 to vector<16x128xf32>
    %64 = arith.minimumf %63, %62 : vector<16x128xf32>
    %65 = vector.broadcast %60 : f32 to vector<16x128xf32>
    %66 = arith.mulf %65, %64 : vector<16x128xf32>
    %67 = arith.addf %59, %66 : vector<16x128xf32>
    %c9 = arith.constant 9 : index
    %68 = memref.load %arg1[%c9] : memref<12xf32, #tpu.memory_space<smem>>
    %cst_14 = arith.constant 0.000000e+00 : f32
    %cst_15 = arith.constant 6.000000e+00 : f32
    %69 = vector.broadcast %cst_14 : f32 to vector<16x128xf32>
    %70 = arith.maximumf %69, %0 : vector<16x128xf32>
    %71 = vector.broadcast %cst_15 : f32 to vector<16x128xf32>
    %72 = arith.minimumf %71, %70 : vector<16x128xf32>
    %73 = vector.broadcast %68 : f32 to vector<16x128xf32>
    %74 = arith.mulf %73, %72 : vector<16x128xf32>
    %75 = arith.addf %67, %74 : vector<16x128xf32>
    %c10 = arith.constant 10 : index
    %76 = memref.load %arg1[%c10] : memref<12xf32, #tpu.memory_space<smem>>
    %cst_16 = arith.constant -5.000000e-01 : f32
    %cst_17 = arith.constant 5.000000e-01 : f32
    %77 = vector.broadcast %cst_16 : f32 to vector<16x128xf32>
    %78 = arith.maximumf %77, %0 : vector<16x128xf32>
    %79 = vector.broadcast %cst_17 : f32 to vector<16x128xf32>
    %80 = arith.minimumf %79, %78 : vector<16x128xf32>
    %81 = vector.broadcast %76 : f32 to vector<16x128xf32>
    %82 = arith.mulf %81, %80 : vector<16x128xf32>
    %83 = arith.addf %75, %82 : vector<16x128xf32>
    %c11 = arith.constant 11 : index
    %84 = memref.load %arg1[%c11] : memref<12xf32, #tpu.memory_space<smem>>
    %cst_18 = arith.constant 1.000000e+00 : f32
    %85 = vector.broadcast %cst_18 : f32 to vector<16x128xf32>
    %86 = arith.addf %85, %1 : vector<16x128xf32>
    %87 = arith.divf %0, %86 : vector<16x128xf32>
    %88 = vector.broadcast %84 : f32 to vector<16x128xf32>
    %89 = arith.mulf %88, %87 : vector<16x128xf32>
    %90 = arith.addf %83, %89 : vector<16x128xf32>
    %c0_19 = arith.constant 0 : index
    %c0_20 = arith.constant 0 : index
    %91 = vector.load %arg3[%c0_19, %c0_20] : memref<16x128xf32, #tpu.memory_space<vmem>>, vector<16x128xf32>
    tpu.vector_store %arg3[%c0_19, %c0_20], %90 {strides = array<i32>} : memref<16x128xf32, #tpu.memory_space<vmem>>, vector<16x128xf32>,
    return
  }
  func.func @transform_0(%arg0: i32, %arg1: memref<12xf32, #tpu.memory_space<smem>>) -> (i32, i32) {
    %c0_i32 = arith.constant 0 : i32
    %c0_i32_0 = arith.constant 0 : i32
    return %arg0, %c0_i32 : i32, i32
  }
  func.func @transform_1(%arg0: i32, %arg1: memref<12xf32, #tpu.memory_space<smem>>) -> (i32, i32) {
    %c0_i32 = arith.constant 0 : i32
    %c0_i32_0 = arith.constant 0 : i32
    return %arg0, %c0_i32 : i32, i32
  }
}

</mosaic_0001>

<llo_original>
// kernel: aaf_forward.1
$region0: #{aaf_forward.1}
  #allocation0 [shape = 'u32[]', space=smem, size = 0x4, offset = 0x4, fixed_abs, tag = 'smem constant byte address 0x4 - core index']
  #allocation1 [shape = 'u32[72,128]{1,0:T(1,128)}', space=vmem, size = 0x9000, scoped, tag = 'internal scratch']
  #allocation2 [shape = 's32[1]{0}', space=sflag, size = 0x4, scoped, tag = 'scoped memory for aaf_forward.1']
  #allocation3 [shape = 'u8[512]{0}', space=smem, size = 0x200, scoped, tag = 'prefetched SMEM operand 0']
  %s0 = inlined_call_operand.vmem [shape: f32[12], index: 0, kind: input, shape index: {}]
  %s1 = inlined_call_operand.vmem [shape: f32[16,128], index: 1, kind: input, shape index: {}]
  %s2 = inlined_call_operand.vmem [shape: f32[16,128], index: 2, kind: output, shape index: {}]
  %s3 = sld [smem:[#allocation0]]
  $region14: #{aaf_forward.1} parent=0
    _
  %s5 = ssub.s32 1, %s3
  %s6 = scalar_select 0, %s5, %s3
  %s8 = sshll.u32 %s0, 4
  %s9 = int_to_ptr.vmem [resolvable:$true] %s8
  %11 = dma.vmem_to_smem %s9, 16, [#allocation3], [#allocation2]
  %13 = dma.done [#allocation2], 16
  %14 = sfence
  // Predicated region
  $region2: #{aaf_forward.1} parent=0 // pred_check
    _
  $region3: #{aaf_forward.1} parent=0 // pred_check_branch
    %16 = sbr.rel (0) target = $region5
  $region4: #{aaf_forward.1} parent=0 // pred_region
    _
  $region5: #{aaf_forward.1} parent=0 // pred_fallthru
    _
  %v17 = vld [vmem:[%s1] sm:$0xff]
  %v18 = vld [vmem:[%s1 + $0x8] sm:$0xff]
  %v19 = vand.u32 2147483647, %v17
  %v20 = vand.u32 2147483647, %v18
  %v21 = vmax.f32 %v17, 0.0
  %v22 = vmax.f32 %v18, 0.0
  %v23 = vmin.f32 %v17, 0.0
  %v24 = vmin.f32 %v18, 0.0
  %v25 = vsub.f32 0.0, %v19
  %v26 = vsub.f32 0.0, %v20
  %v27 = vmul.f32 %v25, 1.442695
  %v28 = vpow.pop %v27
  %v29 = vmul.f32 %v26, 1.442695
  %v30 = vpow.pop %v29
  %v31 = vadd.f32 %v28, 1.0
  %v32 = vlog2.pop %v31
  %v33 = vmul.f32 %v32, 0.6931472
  %v34 = vmul.f32 -0.5, %v28
  %v35 = vadd.f32 %v34, 1.0
  %v36 = vmul.f32 %v35, %v28
  %v37 = vand.u32 2147483647, %v28
  %vm38 = vcmp.lt.f32.partialorder %v37, 0.0004427343
  %v39 = vsel %vm38, %v36, %v33
  %v40 = vadd.f32 %v30, 1.0
  %v41 = vlog2.pop %v40
  %v42 = vmul.f32 %v41, 0.6931472
  %v43 = vmul.f32 -0.5, %v30
  %v44 = vadd.f32 %v43, 1.0
  %v45 = vmul.f32 %v44, %v30
  %v46 = vand.u32 2147483647, %v30
  %vm47 = vcmp.lt.f32.partialorder %v46, 0.0004427343
  %v48 = vsel %vm47, %v45, %v42
  %v49 = vtanh.pop %v17
  %v50 = vtanh.pop %v18
  %vm51 = vcmp.gt.f32.partialorder %v17, 0.0
  %vm52 = vcmp.gt.f32.partialorder %v18, 0.0
  %v53 = vsub.f32 %v28, 1.0
  %v54 = vsub.f32 %v30, 1.0
  %v55 = vsel %vm51, 0.0, %v53
  %v56 = vsel %vm52, 0.0, %v54
  %v57 = vadd.f32 %v28, 1.0
  %v58 = vadd.f32 %v30, 1.0
  %v59 = vrcp.pop %v57
  %v60 = vmul.f32 %v57, %v59
  %v61 = vsub.f32 1.0, %v60
  %v62 = vmul.f32 %v59, %v61
  %v63 = vadd.f32 %v59, %v62
  %vm64 = vweird.f32 %v57
  %vm65 = vweird.f32 %v59
  %vm66 = vmor %vm64, %vm65
  %v67 = vsel %vm66, %v59, %v63
  %v68 = vand.u32 2147483647, %v57
  %vm69 = vcmp.eq.f32.partialorder %v68, 8.507059e+37
  %v70 = vand.u32 %v57, 2147483648
  %v71 = vor.u32 1.1754944e-38, %v70
  %v72 = vsel %vm69, %v71, %v67
  %v73 = vmul.f32 1.0, %v72
  %v74 = vrcp.pop %v58
  %v75 = vmul.f32 %v58, %v74
  %v76 = vsub.f32 1.0, %v75
  %v77 = vmul.f32 %v74, %v76
  %v78 = vadd.f32 %v74, %v77
  %vm79 = vweird.f32 %v58
  %vm80 = vweird.f32 %v74
  %vm81 = vmor %vm79, %vm80
  %v82 = vsel %vm81, %v74, %v78
  %v83 = vand.u32 2147483647, %v58
  %vm84 = vcmp.eq.f32.partialorder %v83, 8.507059e+37
  %v85 = vand.u32 %v58, 2147483648
  %v86 = vor.u32 1.1754944e-38, %v85
  %v87 = vsel %vm84, %v86, %v82
  %v88 = vmul.f32 1.0, %v87
  %vm89 = vcmp.ge.f32.partialorder %v17, 0.0
  %vm90 = vcmp.ge.f32.partialorder %v18, 0.0
  %v91 = vmul.f32 %v28, %v73
  %v92 = vmul.f32 %v30, %v88
  %v93 = vsel %vm89, %v73, %v91
  %v94 = vsel %vm90, %v88, %v92
  %s95 = sld [smem:[#allocation3]]
  %v96 = vstv %s95
  %v97 = vmul.f32 %v96, %v17
  %v98 = vmul.f32 %v96, %v18
  %s99 = sld [smem:[#allocation3 + $0x1]]
  %v100 = vstv %s99
  %v101 = vmul.f32 %v100, %v21
  %v102 = vmul.f32 %v100, %v22
  %v103 = vadd.f32 %v97, %v101
  %v104 = vadd.f32 %v98, %v102
  %s105 = sld [smem:[#allocation3 + $0x2]]
  %v106 = vstv %s105
  %v107 = vmul.f32 %v106, %v23
  %v108 = vmul.f32 %v106, %v24
  %v109 = vadd.f32 %v103, %v107
  %v110 = vadd.f32 %v104, %v108
  %s111 = sld [smem:[#allocation3 + $0x3]]
  %v112 = vstv %s111
  %v113 = vmul.f32 %v112, %v55
  %v114 = vmul.f32 %v112, %v56
  %v115 = vadd.f32 %v109, %v113
  %v116 = vadd.f32 %v110, %v114
  %s117 = sld [smem:[#allocation3 + $0x4]]
  %v118 = vstv %s117
  %v119 = vmul.f32 %v118, %v39
  %v120 = vmul.f32 %v118, %v48
  %v121 = vadd.f32 %v115, %v119
  %v122 = vadd.f32 %v116, %v120
  %s123 = sld [smem:[#allocation3 + $0x5]]
  %v124 = vstv %s123
  %v125 = vmul.f32 %v124, %v49
  %v126 = vmul.f32 %v124, %v50
  %v127 = vadd.f32 %v121, %v125
  %v128 = vadd.f32 %v122, %v126
  %s129 = sld [smem:[#allocation3 + $0x6]]
  %v130 = vstv %s129
  %v131 = vmul.f32 %v130, %v93
  %v132 = vmul.f32 %v130, %v94
  %v133 = vadd.f32 %v127, %v131
  %v134 = vadd.f32 %v128, %v132
  %s135 = sld [smem:[#allocation3 + $0x7]]
  %vm136 = vcmp.gt.f32.partialorder %v19, 0.5
  %vm137 = vcmp.gt.f32.partialorder %v20, 0.5
  %v138 = vsel %vm136, %v17, 0.0
  %v139 = vsel %vm137, %v18, 0.0
  %v140 = vstv %s135
  %v141 = vmul.f32 %v140, %v138
  %v142 = vmul.f32 %v140, %v139
  %v143 = vadd.f32 %v133, %v141
  %v144 = vadd.f32 %v134, %v142
  %s145 = sld [smem:[#allocation3 + $0x8]]
  %v146 = vmax.f32 %v17, -1.0
  %v147 = vmax.f32 %v18, -1.0
  %v148 = vmin.f32 %v146, 1.0
  %v149 = vmin.f32 %v147, 1.0
  %v150 = vstv %s145
  %v151 = vmul.f32 %v150, %v148
  %v152 = vmul.f32 %v150, %v149
  %v153 = vadd.f32 %v143, %v151
  %v154 = vadd.f32 %v144, %v152
  %s155 = sld [smem:[#allocation3 + $0x9]]
  %v156 = vmin.f32 %v21, 6.0
  %v157 = vmin.f32 %v22, 6.0
  %v158 = vstv %s155
  %v159 = vmul.f32 %v158, %v156
  %v160 = vmul.f32 %v158, %v157
  %v161 = vadd.f32 %v153, %v159
  %v162 = vadd.f32 %v154, %v160
  %s163 = sld [smem:[#allocation3 + $0xa]]
  %v164 = vmax.f32 %v17, -0.5
  %v165 = vmax.f32 %v18, -0.5
  %v166 = vmin.f32 %v164, 0.5
  %v167 = vmin.f32 %v165, 0.5
  %v168 = vstv %s163
  %v169 = vmul.f32 %v168, %v166
  %v170 = vmul.f32 %v168, %v167
  %v171 = vadd.f32 %v161, %v169
  %v172 = vadd.f32 %v162, %v170
  %s173 = sld [smem:[#allocation3 + $0xb]]
  %v174 = vadd.f32 %v19, 1.0
  %v175 = vadd.f32 %v20, 1.0
  %v176 = vrcp.pop %v174
  %v177 = vmul.f32 %v174, %v176
  %v178 = vsub.f32 1.0, %v177
  %v179 = vmul.f32 %v176, %v178
  %v180 = vadd.f32 %v176, %v179
  %vm181 = vweird.f32 %v174
  %vm182 = vweird.f32 %v176
  %vm183 = vmor %vm181, %vm182
  %v184 = vsel %vm183, %v176, %v180
  %v185 = vand.u32 2147483647, %v174
  %vm186 = vcmp.eq.f32.partialorder %v185, 8.507059e+37
  %v187 = vand.u32 %v174, 2147483648
  %v188 = vor.u32 1.1754944e-38, %v187
  %v189 = vsel %vm186, %v188, %v184
  %v190 = vmul.f32 %v17, %v189
  %v191 = vrcp.pop %v175
  %v192 = vmul.f32 %v175, %v191
  %v193 = vsub.f32 1.0, %v192
  %v194 = vmul.f32 %v191, %v193
  %v195 = vadd.f32 %v191, %v194
  %vm196 = vweird.f32 %v175
  %vm197 = vweird.f32 %v191
  %vm198 = vmor %vm196, %vm197
  %v199 = vsel %vm198, %v191, %v195
  %v200 = vand.u32 2147483647, %v175
  %vm201 = vcmp.eq.f32.partialorder %v200, 8.507059e+37
  %v202 = vand.u32 %v175, 2147483648
  %v203 = vor.u32 1.1754944e-38, %v202
  %v204 = vsel %vm201, %v203, %v199
  %v205 = vmul.f32 %v18, %v204
  %v206 = vstv %s173
  %v207 = vmul.f32 %v206, %v190
  %v208 = vmul.f32 %v206, %v205
  %v209 = vadd.f32 %v171, %v207
  %v210 = vadd.f32 %v172, %v208
  %211 = vst [vmem:[%s2] sm:$0xff] %v209
  %212 = vst [vmem:[%s2 + $0x8] sm:$0xff] %v210
  // Predicated region
  $region6: #{aaf_forward.1} parent=0 // pred_check
    _
  $region7: #{aaf_forward.1} parent=0 // pred_check_branch
    %214 = sbr.rel (0) target = $region9
  $region8: #{aaf_forward.1} parent=0 // pred_region
    _
  $region9: #{aaf_forward.1} parent=0 // pred_fallthru
    _
  // Predicated region
  $region10: #{aaf_forward.1} parent=0 // pred_check
    _
  $region11: #{aaf_forward.1} parent=0 // pred_check_branch
    %216 = sbr.rel (0) target = $region13
  $region12: #{aaf_forward.1} parent=0 // pred_region
    _
  $region13: #{aaf_forward.1} parent=0 // pred_fallthru
    _

</llo_original>
